<compile_context>
chip_gen: v5e
topology: v5e:2x2
jax: 0.10.0
libtpu: 0.0.40
codegen_flags: <defaults>
</compile_context>

<pallas_src>
import functools

import jax
import jax.numpy as jnp
from jax.experimental import pallas as pl
from jax.experimental.pallas import tpu as pltpu


def _loss_kernel(m_ref, pi_ref, v_ref, tv_ref, out_ref, *,
                 batch, inv_batch, mask_needed):
    """One (TB, A) batch tile: accumulate CE-sum + squared-error-sum."""
    i = pl.program_id(0)
    tb = m_ref.shape[0]

    @pl.when(i == 0)
    def _init():
        out_ref[...] = jnp.zeros_like(out_ref)

    x = m_ref[...].astype(jnp.float32)        # (TB, A) logits
    pi = pi_ref[...].astype(jnp.float32)      # (TB, A) target policy

    # Fused cross-entropy (no log_softmax temporary):
    #   -(pi * (x - lse)).sum(1) == lse * pi.sum(1) - (pi * x).sum(1)
    row_max = jnp.max(x, axis=1, keepdims=True)                              # (TB, 1)
    lse = jnp.log(jnp.sum(jnp.exp(x - row_max), axis=1, keepdims=True)) + row_max
    pi_sum = jnp.sum(pi, axis=1, keepdims=True)                              # (TB, 1)
    pix_sum = jnp.sum(pi * x, axis=1, keepdims=True)                         # (TB, 1)
    ce_rows = lse * pi_sum - pix_sum                                         # (TB, 1)

    # Value loss operands arrive lane-dense as (1, TB).
    dv = v_ref[...].astype(jnp.float32) - tv_ref[...].astype(jnp.float32)    # (1, TB)

    if mask_needed:
        # Last grid step may map past B; those rows/lanes hold unspecified
        # data, so zero their contributions instead of padding inputs in HBM.
        row0 = i * tb
        row_ids = row0 + jax.lax.broadcasted_iota(jnp.int32, (tb, 1), 0)
        ce_rows = jnp.where(row_ids < batch, ce_rows, 0.0)
        lane_ids = row0 + jax.lax.broadcasted_iota(jnp.int32, (1, tb), 1)
        dv = jnp.where(lane_ids < batch, dv, 0.0)

    ce_sum = jnp.sum(ce_rows, axis=0, keepdims=True)                         # (1, 1)
    sq_sum = jnp.sum(dv * dv, axis=1, keepdims=True)                         # (1, 1)
    out_ref[...] += ce_sum + sq_sum

    @pl.when(i == pl.num_programs(0) - 1)
    def _finalize():
        # Single combined divide: (sum CE + sum sqerr) / B == l2 + l1.
        out_ref[...] = out_ref[...] * inv_batch


def _choose_block_rows(actions, itemsize):
    # Keep 2 pipelined (TB, A) inputs x 2 buffers each ~<= 8 MiB so the tiles
    # fit even v5e's 16 MiB scoped-VMEM default (plenty of slack on v7x's
    # 64 MiB physical VMEM), while amortizing per-grid-step overhead.
    budget = 8 * 1024 * 1024
    rows = budget // max(1, 4 * actions * itemsize)
    rows = max(128, min(1024, rows))
    return (rows // 128) * 128


def pallas_loss(m_proba, v, target_pi, target_v, *, block_rows=None):
    """Returns a scalar f32 loss, matching Loss.forward semantics."""
    assert m_proba.ndim == 2 and target_pi.shape == m_proba.shape
    B, A = m_proba.shape

    # Lane-dense layout for the value-loss operands: (B,1)/(B,) -> (1, B).
    v_row = v.reshape(1, -1)
    tv_row = target_v.reshape(1, -1)
    assert v_row.shape[1] == B and tv_row.shape[1] == B

    itemsize = jnp.dtype(m_proba.dtype).itemsize
    if block_rows is None:
        block_rows = _choose_block_rows(A, itemsize)

    if B <= block_rows:
        tb = B                                     # single full-extent block
    else:
        tb = max(128, (block_rows // 128) * 128)   # keep tiles (8,128)-friendly
    num_blocks = pl.cdiv(B, tb)
    mask_needed = (B % tb) != 0

    tile_bytes = tb * A * itemsize
    # 2 big inputs x 2 pipeline buffers + headroom; capped well under v7x's
    # 64 MiB physical VMEM.
    vmem_limit = int(min(48 * 1024 * 1024,
                         max(32 * 1024 * 1024, 6 * tile_bytes + (4 << 20))))

    kernel = functools.partial(_loss_kernel, batch=B, inv_batch=1.0 / B,
                               mask_needed=mask_needed)

    out = pl.pallas_call(
        kernel,
        out_shape=jax.ShapeDtypeStruct((1, 1), jnp.float32),
        grid=(num_blocks,),
        in_specs=[
            pl.BlockSpec((tb, A), lambda i: (i, 0)),   # m_proba tile
            pl.BlockSpec((tb, A), lambda i: (i, 0)),   # target_pi tile
            pl.BlockSpec((1, tb), lambda i: (0, i)),   # v (lane-dense)
            pl.BlockSpec((1, tb), lambda i: (0, i)),   # target_v (lane-dense)
        ],
        out_specs=pl.BlockSpec((1, 1), lambda i: (0, 0)),  # resident accumulator
        compiler_params=pltpu.CompilerParams(
            dimension_semantics=("arbitrary",),            # accumulation axis
            vmem_limit_bytes=vmem_limit,
        ),
    )(m_proba, target_pi, v_row, tv_row)
    return out[0, 0]


def _reference_loss(m_proba, v, target_pi, target_v):
    """Pure-JAX reference mirroring the PyTorch module."""
    log_sm = jax.nn.log_softmax(m_proba.astype(jnp.float32), axis=1)
    l2 = jnp.mean(-jnp.sum(target_pi * log_sm, axis=1))
    l1 = jnp.mean((v.reshape(-1, 1) - target_v.reshape(-1, 1)) ** 2)
    return l1 + l2


if __name__ == "__main__":
    # --- case 1: tiny single-block path (B=8, A=32) ---
    key = jax.random.PRNGKey(0)
    B, A = 8, 32
    k1, k2, k3, k4 = jax.random.split(key, 4)
    m_proba = jax.random.normal(k1, (B, A), dtype=jnp.float32)      # raw logits
    target_pi = jax.nn.softmax(jax.random.normal(k2, (B, A)), axis=1).astype(jnp.float32)
    v = jax.random.normal(k3, (B, 1), dtype=jnp.float32)
    target_v = jax.random.normal(k4, (B,), dtype=jnp.float32)

    loss = jax.block_until_ready(pallas_loss(m_proba, v, target_pi, target_v))
    ref = _reference_loss(m_proba, v, target_pi, target_v)
    assert jnp.allclose(loss, ref, rtol=1e-5, atol=1e-5), (loss, ref)

    # --- case 2: exercise the blocked grid + ragged-last-tile mask (B=300, A=256) ---
    B2, A2 = 300, 256
    j1, j2, j3, j4 = jax.random.split(jax.random.PRNGKey(1), 4)
    m2 = jax.random.normal(j1, (B2, A2), dtype=jnp.float32)
    pi2 = jax.nn.softmax(jax.random.normal(j2, (B2, A2)), axis=1).astype(jnp.float32)
    v2 = jax.random.normal(j3, (B2, 1), dtype=jnp.float32)
    tv2 = jax.random.normal(j4, (B2,), dtype=jnp.float32)

    loss2 = jax.block_until_ready(pallas_loss(m2, v2, pi2, tv2, block_rows=128))
    ref2 = _reference_loss(m2, v2, pi2, tv2)
    assert jnp.allclose(loss2, ref2, rtol=1e-5, atol=1e-5), (loss2, ref2)

    print("KERNEL_OK")
</pallas_src>

<mosaic_0001>
module attributes {stable_mosaic.version = 11 : i64} {
  func.func @_loss_kernel(%arg0: i32, %arg1: memref<8x32xf32, #tpu.memory_space<vmem>>, %arg2: memref<8x32xf32, #tpu.memory_space<vmem>>, %arg3: memref<1x8xf32, #tpu.memory_space<vmem>>, %arg4: memref<1x8xf32, #tpu.memory_space<vmem>>, %arg5: memref<1x1xf32, #tpu.memory_space<vmem>>) attributes {dimension_semantics = [#tpu.dimension_semantics<arbitrary>], iteration_bounds = array<i64: 1>, scalar_prefetch = 0 : i64, scratch_operands = 0 : i64, tpu.core_type = #tpu.core_type<tc>, window_params = [{transform_indices = @transform_0, window_bounds = array<i64: 8, 32>}, {transform_indices = @transform_1, window_bounds = array<i64: 8, 32>}, {transform_indices = @transform_2, window_bounds = array<i64: 1, 8>}, {transform_indices = @transform_3, window_bounds = array<i64: 1, 8>}, {pipeline_mode = #tpu.pipeline_mode<synchronous>, transform_indices = @transform_4, window_bounds = array<i64: 1, 1>}]} {
    %c0_i32 = arith.constant 0 : i32
    %0 = arith.cmpi eq, %arg0, %c0_i32 : i32
    %1 = arith.extui %0 : i1 to i32
    %c0_i32_0 = arith.constant 0 : i32
    %2 = arith.cmpi ne, %1, %c0_i32_0 : i32
    scf.if %2 {
      %cst_19 = arith.constant 0.000000e+00 : f32
      %36 = vector.broadcast %cst_19 : f32 to vector<1x1xf32>
      %c0_20 = arith.constant 0 : index
      %c0_21 = arith.constant 0 : index
      %37 = vector.load %arg5[%c0_20, %c0_21] : memref<1x1xf32, #tpu.memory_space<vmem>>, vector<1x1xf32>
      tpu.vector_store %arg5[%c0_20, %c0_21], %36 {strides = array<i32>} : memref<1x1xf32, #tpu.memory_space<vmem>>, vector<1x1xf32>,
    } else {
    }
    %c0 = arith.constant 0 : index
    %c0_1 = arith.constant 0 : index
    %3 = vector.load %arg1[%c0, %c0_1] : memref<8x32xf32, #tpu.memory_space<vmem>>, vector<8x32xf32>
    %c0_2 = arith.constant 0 : index
    %c0_3 = arith.constant 0 : index
    %4 = vector.load %arg2[%c0_2, %c0_3] : memref<8x32xf32, #tpu.memory_space<vmem>>, vector<8x32xf32>
    %cst = arith.constant dense<0xFF800000> : vector<8xf32>
    %5 = vector.multi_reduction <maximumf>, %3, %cst [1] : vector<8x32xf32> to vector<8xf32>
    %6 = vector.shape_cast %5 : vector<8xf32> to vector<8x1xf32>
    %7 = vector.broadcast %6 : vector<8x1xf32> to vector<8x32xf32>
    %8 = arith.subf %3, %7 : vector<8x32xf32>
    %9 = math.exp %8 : vector<8x32xf32>
    %cst_4 = arith.constant dense<0.000000e+00> : vector<8xf32>
    %10 = vector.multi_reduction <add>, %9, %cst_4 [1] : vector<8x32xf32> to vector<8xf32>
    %11 = vector.shape_cast %10 : vector<8xf32> to vector<8x1xf32>
    %12 = math.log %11 : vector<8x1xf32>
    %13 = arith.addf %12, %6 : vector<8x1xf32>
    %cst_5 = arith.constant dense<0.000000e+00> : vector<8xf32>
    %14 = vector.multi_reduction <add>, %4, %cst_5 [1] : vector<8x32xf32> to vector<8xf32>
    %15 = vector.shape_cast %14 : vector<8xf32> to vector<8x1xf32>
    %16 = arith.mulf %4, %3 : vector<8x32xf32>
    %cst_6 = arith.constant dense<0.000000e+00> : vector<8xf32>
    %17 = vector.multi_reduction <add>, %16, %cst_6 [1] : vector<8x32xf32> to vector<8xf32>
    %18 = vector.shape_cast %17 : vector<8xf32> to vector<8x1xf32>
    %19 = arith.mulf %13, %15 : vector<8x1xf32>
    %20 = arith.subf %19, %18 : vector<8x1xf32>
    %c0_7 = arith.constant 0 : index
    %c0_8 = arith.constant 0 : index
    %21 = vector.load %arg3[%c0_7, %c0_8] : memref<1x8xf32, #tpu.memory_space<vmem>>, vector<1x8xf32>
    %c0_9 = arith.constant 0 : index
    %c0_10 = arith.constant 0 : index
    %22 = vector.load %arg4[%c0_9, %c0_10] : memref<1x8xf32, #tpu.memory_space<vmem>>, vector<1x8xf32>
    %23 = arith.subf %21, %22 : vector<1x8xf32>
    %cst_11 = arith.constant dense<0.000000e+00> : vector<1xf32>
    %24 = vector.multi_reduction <add>, %20, %cst_11 [0] : vector<8x1xf32> to vector<1xf32>
    %25 = vector.shape_cast %24 : vector<1xf32> to vector<1x1xf32>
    %26 = arith.mulf %23, %23 : vector<1x8xf32>
    %cst_12 = arith.constant dense<0.000000e+00> : vector<1xf32>
    %27 = vector.multi_reduction <add>, %26, %cst_12 [1] : vector<1x8xf32> to vector<1xf32>
    %28 = vector.shape_cast %27 : vector<1xf32> to vector<1x1xf32>
    %c0_13 = arith.constant 0 : index
    %c0_14 = arith.constant 0 : index
    %29 = vector.load %arg5[%c0_13, %c0_14] : memref<1x1xf32, #tpu.memory_space<vmem>>, vector<1x1xf32>
    %30 = arith.addf %25, %28 : vector<1x1xf32>
    %31 = arith.addf %29, %30 : vector<1x1xf32>
    %c0_15 = arith.constant 0 : index
    %c0_16 = arith.constant 0 : index
    %32 = vector.load %arg5[%c0_15, %c0_16] : memref<1x1xf32, #tpu.memory_space<vmem>>, vector<1x1xf32>
    tpu.vector_store %arg5[%c0_15, %c0_16], %31 {strides = array<i32>} : memref<1x1xf32, #tpu.memory_space<vmem>>, vector<1x1xf32>,
    %c0_i32_17 = arith.constant 0 : i32
    %33 = arith.cmpi eq, %arg0, %c0_i32_17 : i32
    %34 = arith.extui %33 : i1 to i32
    %c0_i32_18 = arith.constant 0 : i32
    %35 = arith.cmpi ne, %34, %c0_i32_18 : i32
    scf.if %35 {
      %c0_19 = arith.constant 0 : index
      %c0_20 = arith.constant 0 : index
      %36 = vector.load %arg5[%c0_19, %c0_20] : memref<1x1xf32, #tpu.memory_space<vmem>>, vector<1x1xf32>
      %cst_21 = arith.constant 1.250000e-01 : f32
      %37 = vector.broadcast %cst_21 : f32 to vector<1x1xf32>
      %38 = arith.mulf %36, %37 : vector<1x1xf32>
      %c0_22 = arith.constant 0 : index
      %c0_23 = arith.constant 0 : index
      %39 = vector.load %arg5[%c0_22, %c0_23] : memref<1x1xf32, #tpu.memory_space<vmem>>, vector<1x1xf32>
      tpu.vector_store %arg5[%c0_22, %c0_23], %38 {strides = array<i32>} : memref<1x1xf32, #tpu.memory_space<vmem>>, vector<1x1xf32>,
    } else {
    }
    return
  }
  func.func @transform_0(%arg0: i32) -> (i32, i32) {
    %c0_i32 = arith.constant 0 : i32
    %c0_i32_0 = arith.constant 0 : i32
    return %arg0, %c0_i32 : i32, i32
  }
  func.func @transform_1(%arg0: i32) -> (i32, i32) {
    %c0_i32 = arith.constant 0 : i32
    %c0_i32_0 = arith.constant 0 : i32
    return %arg0, %c0_i32 : i32, i32
  }
  func.func @transform_2(%arg0: i32) -> (i32, i32) {
    %c0_i32 = arith.constant 0 : i32
    %c0_i32_0 = arith.constant 0 : i32
    return %c0_i32, %arg0 : i32, i32
  }
  func.func @transform_3(%arg0: i32) -> (i32, i32) {
    %c0_i32 = arith.constant 0 : i32
    %c0_i32_0 = arith.constant 0 : i32
    return %c0_i32, %arg0 : i32, i32
  }
  func.func @transform_4(%arg0: i32) -> (i32, i32) {
    %c0_i32 = arith.constant 0 : i32
    %c0_i32_0 = arith.constant 0 : i32
    %c0_i32_1 = arith.constant 0 : i32
    return %c0_i32, %c0_i32_0 : i32, i32
  }
}

</mosaic_0001>

<llo_original>
// kernel: tpu_custom_call.1
$region0: #{tpu_custom_call.1}
  #allocation0 [shape = 'u32[]', space=smem, size = 0x4, offset = 0x4, fixed_abs, tag = 'smem constant byte address 0x4 - core index']
  #allocation1 [shape = 'u32[72,128]{1,0:T(1,128)}', space=vmem, size = 0x9000, scoped, tag = 'internal scratch']
  %s0 = inlined_call_operand.hbm [shape: f32[8,32], index: 0, kind: input, shape index: {}]
  %s1 = inlined_call_operand.hbm [shape: f32[8,32], index: 1, kind: input, shape index: {}]
  %s2 = inlined_call_operand.vmem [shape: f32[1,8], index: 2, kind: input, shape index: {}]
  %s3 = inlined_call_operand.vmem [shape: f32[1,8], index: 3, kind: input, shape index: {}]
  %s4 = inlined_call_operand.hbm [shape: f32[1,1], index: 4, kind: output, shape index: {}]
  %s5 = sld [smem:[#allocation0]]
  $region42: #{tpu_custom_call.1} parent=0
    _
  %s7 = ssub.s32 1, %s5
  %s8 = scalar_select 0, %s7, %s5
  $region1: #{tpu_custom_call.1} parent=0
    #allocation2 [shape = 'u8[4096]{0}', space=vmem, size = 0x1000, scoped, tag = 'input window, operand 0, single buffered']
    #allocation3 [shape = 's32[1]{0}', space=sflag, size = 0x4, scoped, tag = 'scoped memory for tpu_custom_call.1']
    #allocation4 [shape = 's32[1]{0}', space=sflag, size = 0x4, scoped, tag = 'scoped memory for tpu_custom_call.1']
    #allocation5 [shape = 'u8[4096]{0}', space=vmem, size = 0x1000, scoped, tag = 'input window, operand 1, single buffered']
    #allocation6 [shape = 's32[1]{0}', space=sflag, size = 0x4, scoped, tag = 'scoped memory for tpu_custom_call.1']
    #allocation7 [shape = 'u8[512]{0}', space=vmem, size = 0x400, scoped, tag = 'output window, operand 0, single buffered']
    %9 = vsyncpa [#allocation3], 0
    %10 = vsyncpa [#allocation6], 0
    %11 = vsyncpa [#allocation4], 0
    // Predicated region
    $region2: #{tpu_custom_call.1} parent=1 // pred_check
      _
    $region3: #{tpu_custom_call.1} parent=1 // pred_check_branch
      %13 = sbr.rel (0) target = $region5
    $region4: #{tpu_custom_call.1} parent=1 // pred_region
      %15 = vsyncadd [#allocation3], 0
      %s17 = sshll.u32 %s0, 4
      %s18 = int_to_ptr.hbm [resolvable:$true] %s17
      %s19 = sshll.u32 [#allocation2], 4
      %s20 = int_to_ptr.vmem [resolvable:$true] %s19
      %22 = dma.hbm_to_vmem [thread:$0]  %s18, 128, %s20, [#allocation3]
    $region5: #{tpu_custom_call.1} parent=1 // pred_fallthru
      _
    // Predicated region
    $region6: #{tpu_custom_call.1} parent=1 // pred_check
      _
    $region7: #{tpu_custom_call.1} parent=1 // pred_check_branch
      %24 = sbr.rel (0) target = $region9
    $region8: #{tpu_custom_call.1} parent=1 // pred_region
      %26 = vsyncadd [#allocation6], 0
      %s28 = sshll.u32 %s1, 4
      %s29 = int_to_ptr.hbm [resolvable:$true] %s28
      %s30 = sshll.u32 [#allocation5], 4
      %s31 = int_to_ptr.vmem [resolvable:$true] %s30
      %33 = dma.hbm_to_vmem [thread:$0]  %s29, 128, %s31, [#allocation6]
    $region9: #{tpu_custom_call.1} parent=1 // pred_fallthru
      _
    // Predicated region
    $region10: #{tpu_custom_call.1} parent=1 // pred_check
      _
    $region11: #{tpu_custom_call.1} parent=1 // pred_check_branch
      %35 = sbr.rel (0) target = $region13
    $region12: #{tpu_custom_call.1} parent=1 // pred_region
      _
    $region13: #{tpu_custom_call.1} parent=1 // pred_fallthru
      _
    // Predicated region
    $region14: #{tpu_custom_call.1} parent=1 // pred_check
      _
    $region15: #{tpu_custom_call.1} parent=1 // pred_check_branch
      %37 = sbr.rel (0) target = $region17
    $region16: #{tpu_custom_call.1} parent=1 // pred_region
      _
    $region17: #{tpu_custom_call.1} parent=1 // pred_fallthru
      _
    // Predicated region
    $region18: #{tpu_custom_call.1} parent=1 // pred_check
      _
    $region19: #{tpu_custom_call.1} parent=1 // pred_check_branch
      %39 = sbr.rel (0) target = $region21
    $region20: #{tpu_custom_call.1} parent=1 // pred_region
      %41 = dma.done [#allocation3], 128
    $region21: #{tpu_custom_call.1} parent=1 // pred_fallthru
      _
    // Predicated region
    $region22: #{tpu_custom_call.1} parent=1 // pred_check
      _
    $region23: #{tpu_custom_call.1} parent=1 // pred_check_branch
      %43 = sbr.rel (0) target = $region25
    $region24: #{tpu_custom_call.1} parent=1 // pred_region
      %45 = dma.done [#allocation6], 128
    $region25: #{tpu_custom_call.1} parent=1 // pred_fallthru
      _
    %p46 = scmp.eq.s32.totalorder 0, 0
    // Predicated region
    $region26: #{tpu_custom_call.1} parent=1 // pred_check
      %p47 = pneg %p46
    $region27: #{tpu_custom_call.1} parent=1 // pred_check_branch
      %49 = sbr.rel (%p47) target = $region29
    $region28: #{tpu_custom_call.1} parent=1 // pred_region
      %vm50 = vcmask 0
      %51 = vst.msk [vmem:[#allocation7] sm:$0x1] %vm50, 0.0
    $region29: #{tpu_custom_call.1} parent=1 // pred_fallthru
      _
    %v52 = vld [vmem:[#allocation2] sm:$0xff]
    %v53 = vld [vmem:[#allocation5] sm:$0xff]
    %vm54 = vcmask 261120
    %v55 = vsel %vm54, %v52, -inf
    %56 = vmax.xlane.f32.xlu0 %v55
    %v57 = vpop.xlane.xlu0 %56
    %v58 = vsub.f32 %v52, %v57
    %v59 = vmul.f32 %v58, 1.442695
    %v60 = vpow.pop %v59
    %v61 = vsel %vm54, %v60, 0.0
    %62 = vadd.xlane.f32.xlu0 %v61
    %v63 = vpop.xlane.xlu0 %62
    %v64 = vlog2.pop %v63
    %v65 = vmul.f32 %v64, 0.6931472
    %v66 = vadd.f32 %v65, %v57
    %v67 = vsel %vm54, %v53, 0.0
    %68 = vadd.xlane.f32.xlu0 %v67
    %v69 = vpop.xlane.xlu0 %68
    %v70 = vmul.f32 %v53, %v52
    %v71 = vsel %vm54, %v70, 0.0
    %72 = vadd.xlane.f32.xlu0 %v71
    %v73 = vpop.xlane.xlu0 %72
    %v74 = vmul.f32 %v66, %v69
    %v75 = vsub.f32 %v74, %v73
    %v76 = vld [vmem:[%s2] sm:$0x1]
    %v77 = vld [vmem:[%s3] sm:$0x1]
    %v78 = vsub.f32 %v76, %v77
    %v79 = vrot.slane %v75, 4
    %v80 = vadd.f32 %v75, %v79
    %v81 = vrot.slane %v80, 2
    %v82 = vadd.f32 %v80, %v81
    %v83 = vrot.slane %v82, 1
    %v84 = vadd.f32 %v82, %v83
    %v85 = vmul.f32 %v78, %v78
    %vm86 = vcmask 57344
    %v87 = vsel %vm86, %v85, 0.0
    %88 = vadd.xlane.f32.xlu0 %v87
    %v89 = vpop.xlane.xlu0 %88
    %v90 = vld [vmem:[#allocation7] sm:$0x1]
    %v91 = vadd.f32 %v84, %v89
    %v92 = vadd.f32 %v90, %v91
    %vm93 = vcmask 0
    %94 = vst.msk [vmem:[#allocation7] sm:$0x1] %vm93, %v92
    // Predicated region
    $region30: #{tpu_custom_call.1} parent=1 // pred_check
      %p95 = pneg %p46
    $region31: #{tpu_custom_call.1} parent=1 // pred_check_branch
      %97 = sbr.rel (%p95) target = $region33
    $region32: #{tpu_custom_call.1} parent=1 // pred_region
      %v98 = vld [vmem:[#allocation7] sm:$0x1]
      %v99 = vmul.f32 %v98, 0.125
      %100 = vst.msk [vmem:[#allocation7] sm:$0x1] %vm93, %v99
    $region33: #{tpu_custom_call.1} parent=1 // pred_fallthru
      _
    // Predicated region
    $region34: #{tpu_custom_call.1} parent=1 // pred_check
      _
    $region35: #{tpu_custom_call.1} parent=1 // pred_check_branch
      %102 = sbr.rel (0) target = $region37
    $region36: #{tpu_custom_call.1} parent=1 // pred_region
      %104 = vsyncadd [#allocation4], 0
      %s106 = sshll.u32 [#allocation7], 4
      %s107 = int_to_ptr.vmem [resolvable:$true] %s106
      %s108 = sshll.u32 %s4, 4
      %s109 = int_to_ptr.hbm [resolvable:$true] %s108
      %111 = dma.vmem_to_hbm [thread:$0]  %s107, 16, %s109, [#allocation4]
    $region37: #{tpu_custom_call.1} parent=1 // pred_fallthru
      _
    // Predicated region
    $region38: #{tpu_custom_call.1} parent=1 // pred_check
      _
    $region39: #{tpu_custom_call.1} parent=1 // pred_check_branch
      %113 = sbr.rel (0) target = $region41
    $region40: #{tpu_custom_call.1} parent=1 // pred_region
      %115 = dma.done [#allocation4], 16
    $region41: #{tpu_custom_call.1} parent=1 // pred_fallthru
      _
    %116 = vsyncpa [#allocation3], 1
    %117 = vsyncpa [#allocation6], 1
    %118 = vsyncpa [#allocation4], 1

</llo_original>
